<compile_context>
chip_gen: v7x
topology: tpu7x:2x2x1
jax: 0.10.0
libtpu: 0.0.40
codegen_flags: <defaults>
</compile_context>

<pallas_src>
import jax
import jax.numpy as jnp
from jax import lax
from jax.experimental import pallas as pl
from jax.experimental.pallas import tpu as pltpu


# ----------------------------- gates (static glue) -----------------------------
class ThroughGate:
    """gate(loss, epoch) = loss"""
    def weight(self, epoch):
        return 1.0


class CutoffGate:
    """Edges skips non-self sources whose gate is a CutoffGate (self edge -> 0)."""
    def weight(self, epoch):
        return 0.0


class LinearGate:
    """gate(loss, epoch) = loss * epoch / end_epoch"""
    def __init__(self, end_epoch):
        self.end_epoch = end_epoch

    def weight(self, epoch):
        return float(epoch) / float(self.end_epoch)


# --------------------------------- kernel ----------------------------------------
def _sum_all_keepdims(x):
    # [B, C] -> (1, 1): lane reduction then sublane reduction.
    return jnp.sum(jnp.sum(x, axis=-1, keepdims=True), axis=0, keepdims=True)


def _make_edges_kernel(n_src):
    """Build a single-invocation kernel for n_src non-cutoff source outputs.

    Ref layout:
      refs[0]            : SMEM f32 [n_src + 1]  gate weights (0 = self, 1.. = sources)
      refs[1]            : VMEM [B, C]           target logits
      refs[2]            : VMEM [B, 1] int32     class indices
      refs[3 : 3+n_src]  : VMEM [B, C]           source logits (one ref per source)
      refs[3+n_src]      : VMEM [1, 1] f32       output (scalar loss)
    """

    def kernel(*refs):
        gate_w_ref = refs[0]
        tgt_ref = refs[1]
        lab_ref = refs[2]
        src_refs = refs[3:3 + n_src]
        out_ref = refs[3 + n_src]

        B, C = tgt_ref.shape
        inv_b = 1.0 / B

        # --- target log-softmax, computed once and reused for every edge -------
        tgt = tgt_ref[...].astype(jnp.float32)
        m_t = jnp.max(tgt, axis=-1, keepdims=True)
        z_t = tgt - m_t
        e_t = jnp.exp(z_t)
        s_t = jnp.sum(e_t, axis=-1, keepdims=True)
        log_p_t = z_t - jnp.log(s_t)                              # [B, C]

        # --- self edge: CrossEntropyLoss(reduction='mean'), hard labels --------
        labels = lab_ref[...]                                     # [B, 1] int32
        cols = lax.broadcasted_iota(jnp.int32, (B, C), 1)
        onehot = (cols == labels).astype(jnp.float32)
        ce = _sum_all_keepdims(onehot * (-log_p_t)) * inv_b       # (1, 1)
        loss = gate_w_ref[0] * ce

        # --- distillation edges: KLDivLoss(batchmean)(log_p_t, softmax(src)) ---
        # TODO(synk): source_output.detach() is a no-op here (forward-only port).
        if n_src > 0:
            kl_acc = jnp.zeros((1, 1), jnp.float32)
            for j, src_ref in enumerate(src_refs):                # static unroll
                src = src_ref[...].astype(jnp.float32)
                m_s = jnp.max(src, axis=-1, keepdims=True)
                z_s = src - m_s
                e_s = jnp.exp(z_s)                                # single exp per src
                s_s = jnp.sum(e_s, axis=-1, keepdims=True)
                log_s_s = jnp.log(s_s)
                p_s = e_s / s_s                                   # softmax(source)
                log_p_s = z_s - log_s_s                           # log_softmax(source)
                kl = _sum_all_keepdims(p_s * (log_p_s - log_p_t)) * inv_b
                kl_acc = kl_acc + gate_w_ref[j + 1] * kl
            loss = loss + kl_acc * (1.0 / n_src)

        out_ref[...] = loss

    return kernel


# ------------------------------ pallas_call glue ---------------------------------
def _edges_call(gate_w, tgt, labels2d, src_list):
    n_src = len(src_list)
    kernel = _make_edges_kernel(n_src)
    in_specs = (
        [pl.BlockSpec(memory_space=pltpu.MemorySpace.SMEM)]            # gate weights
        + [pl.BlockSpec(memory_space=pltpu.MemorySpace.VMEM)] * (2 + n_src)
    )
    out = pl.pallas_call(
        kernel,
        out_shape=jax.ShapeDtypeStruct((1, 1), jnp.float32),
        in_specs=in_specs,
        out_specs=pl.BlockSpec(memory_space=pltpu.MemorySpace.VMEM),
    )(gate_w, tgt, labels2d, *src_list)
    return out[0, 0]


class Edges:
    """JAX/Pallas port of ktg.graph.Edges (forward only)."""

    def __init__(self, gates):
        self.gates = gates

    def __call__(self, model_id, outputs, labels, epoch):
        if model_id < 0 or model_id >= len(outputs):
            raise ValueError(f'Invalid model_id: {model_id}')
        target_output = outputs[model_id]
        label = labels[model_id]
        B = target_output.shape[0]

        self_w = self.gates[model_id].weight(epoch)
        src_list, src_w = [], []
        for i, (source_output, gate) in enumerate(zip(outputs, self.gates)):
            if i == model_id:
                continue
            if gate.__class__.__name__ == 'CutoffGate':
                continue
            src_list.append(source_output)        # no stack, no dtype up-cast
            src_w.append(gate.weight(epoch))

        labels2d = label.astype(jnp.int32).reshape(B, 1)
        gate_w = jnp.asarray([self_w] + src_w, dtype=jnp.float32)

        loss = _edges_call(gate_w, target_output, labels2d, src_list)
        return loss.reshape(())


# ----------------------------- pure-JAX reference --------------------------------
def _reference(model_id, outputs, labels, epoch, gates):
    tgt = outputs[model_id].astype(jnp.float32)
    log_p_t = jax.nn.log_softmax(tgt, axis=-1)
    lab = labels[model_id].astype(jnp.int32)
    ce = -jnp.mean(jnp.take_along_axis(log_p_t, lab[:, None], axis=1))
    loss = gates[model_id].weight(epoch) * ce
    kls = []
    for i, (src, gate) in enumerate(zip(outputs, gates)):
        if i == model_id or gate.__class__.__name__ == 'CutoffGate':
            continue
        s = src.astype(jnp.float32)
        p_s = jax.nn.softmax(s, axis=-1)
        log_p_s = jax.nn.log_softmax(s, axis=-1)
        kl = jnp.sum(p_s * (log_p_s - log_p_t)) / tgt.shape[0]
        kls.append(gate.weight(epoch) * kl)
    if kls:
        loss = loss + jnp.mean(jnp.stack(kls))
    return loss


# ------------------------------------ main ---------------------------------------
if __name__ == "__main__":
    key = jax.random.PRNGKey(0)
    K = 4   # number of models / graph nodes
    B = 8   # batch
    C = 32  # classes

    keys = jax.random.split(key, K + 1)
    outputs = [jax.random.normal(keys[i], (B, C), dtype=jnp.float32) for i in range(K)]
    shared_label = jax.random.randint(keys[K], (B,), 0, C, dtype=jnp.int32)
    labels = [shared_label for _ in range(K)]

    model_id = 0
    epoch = 3
    gates = [ThroughGate(), CutoffGate(), ThroughGate(), LinearGate(end_epoch=10)]

    edges = Edges(gates)
    loss = edges(model_id, outputs, labels, epoch)
    loss = jax.block_until_ready(loss)

    ref = _reference(model_id, outputs, labels, epoch, gates)
    assert jnp.allclose(loss, ref, rtol=1e-5, atol=1e-5), (float(loss), float(ref))

    # Also exercise the "no non-cutoff sources" path (self edge only).
    gates2 = [ThroughGate(), CutoffGate(), CutoffGate(), CutoffGate()]
    edges2 = Edges(gates2)
    loss2 = jax.block_until_ready(edges2(model_id, outputs, labels, epoch))
    ref2 = _reference(model_id, outputs, labels, epoch, gates2)
    assert jnp.allclose(loss2, ref2, rtol=1e-5, atol=1e-5), (float(loss2), float(ref2))

    print("KERNEL_OK")
</pallas_src>

<mosaic_0001>
module attributes {stable_mosaic.version = 11 : i64} {
  func.func @kernel(%arg0: memref<3xf32, #tpu.memory_space<smem>>, %arg1: memref<8x32xf32, #tpu.memory_space<vmem>>, %arg2: memref<8x1xi32, #tpu.memory_space<vmem>>, %arg3: memref<8x32xf32, #tpu.memory_space<vmem>>, %arg4: memref<8x32xf32, #tpu.memory_space<vmem>>, %arg5: memref<1x1xf32, #tpu.memory_space<vmem>>) attributes {dimension_semantics = [], scalar_prefetch = 0 : i64, scratch_operands = 0 : i64, tpu.core_type = #tpu.core_type<tc>} {
    %c0 = arith.constant 0 : index
    %c0_0 = arith.constant 0 : index
    %0 = vector.load %arg1[%c0, %c0_0] : memref<8x32xf32, #tpu.memory_space<vmem>>, vector<8x32xf32>
    %cst = arith.constant dense<0xFF800000> : vector<8xf32>
    %1 = vector.multi_reduction <maximumf>, %0, %cst [1] : vector<8x32xf32> to vector<8xf32>
    %2 = vector.shape_cast %1 : vector<8xf32> to vector<8x1xf32>
    %3 = vector.broadcast %2 : vector<8x1xf32> to vector<8x32xf32>
    %4 = arith.subf %0, %3 : vector<8x32xf32>
    %5 = math.exp %4 : vector<8x32xf32>
    %cst_1 = arith.constant dense<0.000000e+00> : vector<8xf32>
    %6 = vector.multi_reduction <add>, %5, %cst_1 [1] : vector<8x32xf32> to vector<8xf32>
    %7 = vector.shape_cast %6 : vector<8xf32> to vector<8x1xf32>
    %8 = math.log %7 : vector<8x1xf32>
    %9 = vector.broadcast %8 : vector<8x1xf32> to vector<8x32xf32>
    %10 = arith.subf %4, %9 : vector<8x32xf32>
    %c0_2 = arith.constant 0 : index
    %c0_3 = arith.constant 0 : index
    %11 = vector.load %arg2[%c0_2, %c0_3] : memref<8x1xi32, #tpu.memory_space<vmem>>, vector<8x1xi32>
    %12 = tpu.iota {dimensions = array<i32: 1>} : vector<8x32xi32>
    %13 = vector.broadcast %11 : vector<8x1xi32> to vector<8x32xi32>
    %14 = arith.cmpi eq, %12, %13 : vector<8x32xi32>
    %15 = arith.extui %14 : vector<8x32xi1> to vector<8x32xi32>
    %16 = arith.sitofp %15 : vector<8x32xi32> to vector<8x32xf32>
    %cst_4 = arith.constant 0.000000e+00 : f32
    %17 = vector.broadcast %cst_4 : f32 to vector<8x32xf32>
    %18 = arith.subf %17, %10 : vector<8x32xf32>
    %19 = arith.mulf %16, %18 : vector<8x32xf32>
    %cst_5 = arith.constant dense<0.000000e+00> : vector<8xf32>
    %20 = vector.multi_reduction <add>, %19, %cst_5 [1] : vector<8x32xf32> to vector<8xf32>
    %21 = vector.shape_cast %20 : vector<8xf32> to vector<8x1xf32>
    %cst_6 = arith.constant dense<0.000000e+00> : vector<1xf32>
    %22 = vector.multi_reduction <add>, %21, %cst_6 [0] : vector<8x1xf32> to vector<1xf32>
    %23 = vector.shape_cast %22 : vector<1xf32> to vector<1x1xf32>
    %cst_7 = arith.constant 1.250000e-01 : f32
    %24 = vector.broadcast %cst_7 : f32 to vector<1x1xf32>
    %25 = arith.mulf %23, %24 : vector<1x1xf32>
    %c0_8 = arith.constant 0 : index
    %26 = memref.load %arg0[%c0_8] : memref<3xf32, #tpu.memory_space<smem>>
    %27 = vector.broadcast %26 : f32 to vector<1x1xf32>
    %28 = arith.mulf %27, %25 : vector<1x1xf32>
    %cst_9 = arith.constant 0.000000e+00 : f32
    %29 = vector.broadcast %cst_9 : f32 to vector<1x1xf32>
    %c0_10 = arith.constant 0 : index
    %c0_11 = arith.constant 0 : index
    %30 = vector.load %arg3[%c0_10, %c0_11] : memref<8x32xf32, #tpu.memory_space<vmem>>, vector<8x32xf32>
    %cst_12 = arith.constant dense<0xFF800000> : vector<8xf32>
    %31 = vector.multi_reduction <maximumf>, %30, %cst_12 [1] : vector<8x32xf32> to vector<8xf32>
    %32 = vector.shape_cast %31 : vector<8xf32> to vector<8x1xf32>
    %33 = vector.broadcast %32 : vector<8x1xf32> to vector<8x32xf32>
    %34 = arith.subf %30, %33 : vector<8x32xf32>
    %35 = math.exp %34 : vector<8x32xf32>
    %cst_13 = arith.constant dense<0.000000e+00> : vector<8xf32>
    %36 = vector.multi_reduction <add>, %35, %cst_13 [1] : vector<8x32xf32> to vector<8xf32>
    %37 = vector.shape_cast %36 : vector<8xf32> to vector<8x1xf32>
    %38 = math.log %37 : vector<8x1xf32>
    %39 = vector.broadcast %37 : vector<8x1xf32> to vector<8x32xf32>
    %40 = arith.divf %35, %39 : vector<8x32xf32>
    %41 = vector.broadcast %38 : vector<8x1xf32> to vector<8x32xf32>
    %42 = arith.subf %34, %41 : vector<8x32xf32>
    %43 = arith.subf %42, %10 : vector<8x32xf32>
    %44 = arith.mulf %40, %43 : vector<8x32xf32>
    %cst_14 = arith.constant dense<0.000000e+00> : vector<8xf32>
    %45 = vector.multi_reduction <add>, %44, %cst_14 [1] : vector<8x32xf32> to vector<8xf32>
    %46 = vector.shape_cast %45 : vector<8xf32> to vector<8x1xf32>
    %cst_15 = arith.constant dense<0.000000e+00> : vector<1xf32>
    %47 = vector.multi_reduction <add>, %46, %cst_15 [0] : vector<8x1xf32> to vector<1xf32>
    %48 = vector.shape_cast %47 : vector<1xf32> to vector<1x1xf32>
    %cst_16 = arith.constant 1.250000e-01 : f32
    %49 = vector.broadcast %cst_16 : f32 to vector<1x1xf32>
    %50 = arith.mulf %48, %49 : vector<1x1xf32>
    %c1 = arith.constant 1 : index
    %51 = memref.load %arg0[%c1] : memref<3xf32, #tpu.memory_space<smem>>
    %52 = vector.broadcast %51 : f32 to vector<1x1xf32>
    %53 = arith.mulf %52, %50 : vector<1x1xf32>
    %54 = arith.addf %29, %53 : vector<1x1xf32>
    %c0_17 = arith.constant 0 : index
    %c0_18 = arith.constant 0 : index
    %55 = vector.load %arg4[%c0_17, %c0_18] : memref<8x32xf32, #tpu.memory_space<vmem>>, vector<8x32xf32>
    %cst_19 = arith.constant dense<0xFF800000> : vector<8xf32>
    %56 = vector.multi_reduction <maximumf>, %55, %cst_19 [1] : vector<8x32xf32> to vector<8xf32>
    %57 = vector.shape_cast %56 : vector<8xf32> to vector<8x1xf32>
    %58 = vector.broadcast %57 : vector<8x1xf32> to vector<8x32xf32>
    %59 = arith.subf %55, %58 : vector<8x32xf32>
    %60 = math.exp %59 : vector<8x32xf32>
    %cst_20 = arith.constant dense<0.000000e+00> : vector<8xf32>
    %61 = vector.multi_reduction <add>, %60, %cst_20 [1] : vector<8x32xf32> to vector<8xf32>
    %62 = vector.shape_cast %61 : vector<8xf32> to vector<8x1xf32>
    %63 = math.log %62 : vector<8x1xf32>
    %64 = vector.broadcast %62 : vector<8x1xf32> to vector<8x32xf32>
    %65 = arith.divf %60, %64 : vector<8x32xf32>
    %66 = vector.broadcast %63 : vector<8x1xf32> to vector<8x32xf32>
    %67 = arith.subf %59, %66 : vector<8x32xf32>
    %68 = arith.subf %67, %10 : vector<8x32xf32>
    %69 = arith.mulf %65, %68 : vector<8x32xf32>
    %cst_21 = arith.constant dense<0.000000e+00> : vector<8xf32>
    %70 = vector.multi_reduction <add>, %69, %cst_21 [1] : vector<8x32xf32> to vector<8xf32>
    %71 = vector.shape_cast %70 : vector<8xf32> to vector<8x1xf32>
    %cst_22 = arith.constant dense<0.000000e+00> : vector<1xf32>
    %72 = vector.multi_reduction <add>, %71, %cst_22 [0] : vector<8x1xf32> to vector<1xf32>
    %73 = vector.shape_cast %72 : vector<1xf32> to vector<1x1xf32>
    %cst_23 = arith.constant 1.250000e-01 : f32
    %74 = vector.broadcast %cst_23 : f32 to vector<1x1xf32>
    %75 = arith.mulf %73, %74 : vector<1x1xf32>
    %c2 = arith.constant 2 : index
    %76 = memref.load %arg0[%c2] : memref<3xf32, #tpu.memory_space<smem>>
    %77 = vector.broadcast %76 : f32 to vector<1x1xf32>
    %78 = arith.mulf %77, %75 : vector<1x1xf32>
    %79 = arith.addf %54, %78 : vector<1x1xf32>
    %cst_24 = arith.constant 5.000000e-01 : f32
    %80 = vector.broadcast %cst_24 : f32 to vector<1x1xf32>
    %81 = arith.mulf %79, %80 : vector<1x1xf32>
    %82 = arith.addf %28, %81 : vector<1x1xf32>
    %c0_25 = arith.constant 0 : index
    %c0_26 = arith.constant 0 : index
    %83 = vector.load %arg5[%c0_25, %c0_26] : memref<1x1xf32, #tpu.memory_space<vmem>>, vector<1x1xf32>
    tpu.vector_store %arg5[%c0_25, %c0_26], %82 {strides = array<i32>} : memref<1x1xf32, #tpu.memory_space<vmem>>, vector<1x1xf32>,
    return
  }
}

</mosaic_0001>

<llo_original>
// kernel: tpu_custom_call.1
$region0: #{tpu_custom_call.1}
  #allocation0 [shape = 'u32[]', space=smem, size = 0x4, offset = 0x4, fixed_abs, tag = 'smem constant byte address 0x4 - core index']
  #allocation1 [shape = 'u32[144,128]{1,0:T(1,128)}', space=vmem, size = 0x12000, scoped, tag = 'internal scratch']
  %s0 = inlined_call_operand.hbm [shape: f32[3], index: 0, kind: input, shape index: {}]
  %s1 = inlined_call_operand.vmem [shape: f32[8,32], index: 1, kind: input, shape index: {}]
  %s2 = inlined_call_operand.vmem [shape: s32[8,1], index: 2, kind: input, shape index: {}]
  %s3 = inlined_call_operand.vmem [shape: f32[8,32], index: 3, kind: input, shape index: {}]
  %s4 = inlined_call_operand.vmem [shape: f32[8,32], index: 4, kind: input, shape index: {}]
  %s5 = inlined_call_operand.hbm [shape: f32[1,1], index: 5, kind: output, shape index: {}]
  %s6 = sld [smem:[#allocation0]]
  $region34: #{tpu_custom_call.1} parent=0
    _
  %s8 = ssub.s32 1, %s6
  %s9 = scalar_select 0, %s8, %s6
  $region1: #{tpu_custom_call.1} parent=0
    #allocation2 [shape = 'u8[512]{0}', space=smem, size = 0x200, scoped, tag = 'input window, operand 0, single buffered']
    #allocation3 [shape = 's32[1]{0}', space=sflag, size = 0x4, scoped, tag = 'scoped memory for tpu_custom_call.1']
    #allocation4 [shape = 's32[1]{0}', space=sflag, size = 0x4, scoped, tag = 'scoped memory for tpu_custom_call.1']
    #allocation5 [shape = 'u8[512]{0}', space=vmem, size = 0x400, scoped, tag = 'output window, operand 0, single buffered']
    %10 = vsyncpa [#allocation4], 0
    %11 = vsyncpa [#allocation3], 0
    // Predicated region
    $region2: #{tpu_custom_call.1} parent=1 // pred_check
      _
    $region3: #{tpu_custom_call.1} parent=1 // pred_check_branch
      %13 = sbr.rel (0) target = $region5
    $region4: #{tpu_custom_call.1} parent=1 // pred_region
      %s15 = ssub.s32 16, 16
      %16 = vsyncadd [#allocation4], %s15
      %19 = dma.hbm_to_smem %s0, 16, [#allocation2], [#allocation4]
    $region5: #{tpu_custom_call.1} parent=1 // pred_fallthru
      _
    // Predicated region
    $region6: #{tpu_custom_call.1} parent=1 // pred_check
      _
    $region7: #{tpu_custom_call.1} parent=1 // pred_check_branch
      %21 = sbr.rel (0) target = $region9
    $region8: #{tpu_custom_call.1} parent=1 // pred_region
      _
    $region9: #{tpu_custom_call.1} parent=1 // pred_fallthru
      _
    // Predicated region
    $region10: #{tpu_custom_call.1} parent=1 // pred_check
      _
    $region11: #{tpu_custom_call.1} parent=1 // pred_check_branch
      %23 = sbr.rel (0) target = $region13
    $region12: #{tpu_custom_call.1} parent=1 // pred_region
      _
    $region13: #{tpu_custom_call.1} parent=1 // pred_fallthru
      _
    // Predicated region
    $region14: #{tpu_custom_call.1} parent=1 // pred_check
      _
    $region15: #{tpu_custom_call.1} parent=1 // pred_check_branch
      %25 = sbr.rel (0) target = $region17
    $region16: #{tpu_custom_call.1} parent=1 // pred_region
      _
    $region17: #{tpu_custom_call.1} parent=1 // pred_fallthru
      _
    // Predicated region
    $region18: #{tpu_custom_call.1} parent=1 // pred_check
      _
    $region19: #{tpu_custom_call.1} parent=1 // pred_check_branch
      %27 = sbr.rel (0) target = $region21
    $region20: #{tpu_custom_call.1} parent=1 // pred_region
      _
    $region21: #{tpu_custom_call.1} parent=1 // pred_fallthru
      _
    // Predicated region
    $region22: #{tpu_custom_call.1} parent=1 // pred_check
      _
    $region23: #{tpu_custom_call.1} parent=1 // pred_check_branch
      %29 = sbr.rel (0) target = $region25
    $region24: #{tpu_custom_call.1} parent=1 // pred_region
      %30 = dma.done [#allocation4], 16
    $region25: #{tpu_custom_call.1} parent=1 // pred_fallthru
      _
    %31 = sfence
    %v32 = vld [vmem:[%s1] sm:$0xff]
    %vm33 = vcmask 261120
    %v34 = vsel %vm33, %v32, -inf
    %35 = vmax.xlane.f32.xlu0 %v34
    %v36 = vpop.xlane.xlu0 %35
    %v37 = vsub.f32 %v32, %v36
    %v38 = vmul.f32 %v37, 1.442695
    %v39 = vpow.pop %v38
    %v40 = vsel %vm33, %v39, 0.0
    %41 = vadd.xlane.f32.xlu0 %v40
    %v42 = vpop.xlane.xlu0 %41
    %v43 = vlog2.pop %v42
    %v44 = vmul.f32 %v43, 0.6931472
    %v45 = vsub.f32 %v37, %v44
    %v46 = vld [vmem:[%s2] sm:$0xff]
    %v47 = vlaneseq
    %v48 = vand.u32 %v47, 127
    %49 = vset.pattern.permute.xlu0 0
    %50 = vperm.xlu0 %49, %v46
    %v51 = vpop.permute.xlu0 %50
    %vm52 = vcmp.eq.s32.totalorder %v48, %v51
    %v53 = vsel %vm52, 1, 0
    %v54 = vcvt.s32.f32 %v53
    %v55 = vsub.f32 0.0, %v45
    %v56 = vmul.f32 %v54, %v55
    %v57 = vsel %vm33, %v56, 0.0
    %58 = vadd.xlane.f32.xlu0 %v57
    %v59 = vpop.xlane.xlu0 %58
    %v60 = vrot.slane %v59, 4
    %v61 = vadd.f32 %v59, %v60
    %v62 = vrot.slane %v61, 2
    %v63 = vadd.f32 %v61, %v62
    %v64 = vrot.slane %v63, 1
    %v65 = vadd.f32 %v63, %v64
    %v66 = vmul.f32 %v65, 0.125
    %s67 = sld [smem:[#allocation2]]
    %v68 = vstv %s67
    %v69 = vmul.f32 %v68, %v66
    %v70 = vld [vmem:[%s3] sm:$0xff]
    %v71 = vsel %vm33, %v70, -inf
    %72 = vmax.xlane.f32.xlu0 %v71
    %v73 = vpop.xlane.xlu0 %72
    %v74 = vsub.f32 %v70, %v73
    %v75 = vmul.f32 %v74, 1.442695
    %v76 = vpow.pop %v75
    %v77 = vsel %vm33, %v76, 0.0
    %78 = vadd.xlane.f32.xlu0 %v77
    %v79 = vpop.xlane.xlu0 %78
    %v80 = vlog2.pop %v79
    %v81 = vmul.f32 %v80, 0.6931472
    %v82 = vrcp.pop %v79
    %v83 = vmul.f32 %v76, %v82
    %v84 = vsub.f32 %v74, %v81
    %v85 = vsub.f32 %v84, %v45
    %v86 = vmul.f32 %v83, %v85
    %v87 = vsel %vm33, %v86, 0.0
    %88 = vadd.xlane.f32.xlu0 %v87
    %v89 = vpop.xlane.xlu0 %88
    %v90 = vrot.slane %v89, 4
    %v91 = vadd.f32 %v89, %v90
    %v92 = vrot.slane %v91, 2
    %v93 = vadd.f32 %v91, %v92
    %v94 = vrot.slane %v93, 1
    %v95 = vadd.f32 %v93, %v94
    %v96 = vmul.f32 %v95, 0.125
    %s97 = sld [smem:[#allocation2 + $0x1]]
    %v98 = vstv %s97
    %v99 = vmul.f32 %v98, %v96
    %v100 = vadd.f32 %v99, 0.0
    %v101 = vld [vmem:[%s4] sm:$0xff]
    %v102 = vsel %vm33, %v101, -inf
    %103 = vmax.xlane.f32.xlu0 %v102
    %v104 = vpop.xlane.xlu0 %103
    %v105 = vsub.f32 %v101, %v104
    %v106 = vmul.f32 %v105, 1.442695
    %v107 = vpow.pop %v106
    %v108 = vsel %vm33, %v107, 0.0
    %109 = vadd.xlane.f32.xlu0 %v108
    %v110 = vpop.xlane.xlu0 %109
    %v111 = vlog2.pop %v110
    %v112 = vmul.f32 %v111, 0.6931472
    %v113 = vrcp.pop %v110
    %v114 = vmul.f32 %v107, %v113
    %v115 = vsub.f32 %v105, %v112
    %v116 = vsub.f32 %v115, %v45
    %v117 = vmul.f32 %v114, %v116
    %v118 = vsel %vm33, %v117, 0.0
    %119 = vadd.xlane.f32.xlu0 %v118
    %v120 = vpop.xlane.xlu0 %119
    %v121 = vrot.slane %v120, 4
    %v122 = vadd.f32 %v120, %v121
    %v123 = vrot.slane %v122, 2
    %v124 = vadd.f32 %v122, %v123
    %v125 = vrot.slane %v124, 1
    %v126 = vadd.f32 %v124, %v125
    %v127 = vmul.f32 %v126, 0.125
    %s128 = sld [smem:[#allocation2 + $0x2]]
    %v129 = vstv %s128
    %v130 = vmul.f32 %v129, %v127
    %v131 = vadd.f32 %v100, %v130
    %v132 = vmul.f32 %v131, 0.5
    %v133 = vadd.f32 %v69, %v132
    %vm134 = vcmask 0
    %135 = vst.msk [vmem:[#allocation5] sm:$0x1] %vm134, %v133
    // Predicated region
    $region26: #{tpu_custom_call.1} parent=1 // pred_check
      _
    $region27: #{tpu_custom_call.1} parent=1 // pred_check_branch
      %137 = sbr.rel (0) target = $region29
    $region28: #{tpu_custom_call.1} parent=1 // pred_region
      %s139 = ssub.s32 16, 16
      %140 = vsyncadd [#allocation3], %s139
      %s142 = sshll.u32 [#allocation5], 4
      %s143 = int_to_ptr.vmem [resolvable:$true] %s142
      %145 = dma.vmem_to_hbm [thread:$0]  %s143, 16, %s5, [#allocation3]
    $region29: #{tpu_custom_call.1} parent=1 // pred_fallthru
      _
    // Predicated region
    $region30: #{tpu_custom_call.1} parent=1 // pred_check
      _
    $region31: #{tpu_custom_call.1} parent=1 // pred_check_branch
      %147 = sbr.rel (0) target = $region33
    $region32: #{tpu_custom_call.1} parent=1 // pred_region
      %148 = dma.done [#allocation3], 16
    $region33: #{tpu_custom_call.1} parent=1 // pred_fallthru
      _
    %149 = vsyncpa [#allocation3], 1
    %150 = vsyncpa [#allocation4], 1

</llo_original>
